<compile_context>
chip_gen: v7x
topology: tpu7x:2x2x1
jax: 0.10.0
libtpu: 0.0.40
codegen_flags: <defaults>
</compile_context>

<pallas_src>
import functools

import jax
import jax.numpy as jnp
from jax import lax
from jax.experimental import pallas as pl
from jax.experimental.pallas import tpu as pltpu


# ---------------------------------------------------------------------------
# Kernel body
# ---------------------------------------------------------------------------
def _mlp_prod_decoder_kernel(x_ref, w1_ref, b1_ref, w2_ref, b2_ref, ot_ref,
                             *, apply_sigmoid):
    """One batch tile: Linear -> ReLU -> Linear [-> sigmoid], feature-major output.

      x  : (TN, E) f32   natural row-major input tile (cast to bf16 here)
      w1 : (H, E)  bf16  PyTorch nn.Linear layout (out, in); VMEM-resident
      b1 : (H, 1)  f32
      w2 : (C, H)  bf16  VMEM-resident
      b2 : (C, 1)  f32
      out: (C, TN)       batch on lanes -> lane-dense stores (C=8 on sublanes)
    """
    x = x_ref[...].astype(jnp.bfloat16)
    # Layer 1 as W1 @ x^T: contract the last dims of both operands so no
    # transposed copy of the x tile is materialized; result is already (H, TN).
    h = lax.dot_general(w1_ref[...], x, (((1,), (1,)), ((), ())),
                        preferred_element_type=jnp.float32)      # (H, TN) f32 acc
    h = jnp.maximum(h + b1_ref[...], 0.0)                         # bias + ReLU (f32, VPU)
    out = jnp.dot(w2_ref[...], h.astype(jnp.bfloat16),
                  preferred_element_type=jnp.float32)             # (C, TN) f32 acc
    out = out + b2_ref[...]
    if apply_sigmoid:
        out = jax.nn.sigmoid(out)                                 # EUP epilogue (free slot)
    ot_ref[...] = out.astype(ot_ref.dtype)                        # lane-dense store


# ---------------------------------------------------------------------------
# Wrapper
# ---------------------------------------------------------------------------
def _choose_block_n(n):
    """Lane-tile width for the batch axis (always a multiple of 128)."""
    n_lane = pl.cdiv(n, 128) * 128
    if n_lane <= 4096:
        return n_lane                       # single tile
    if n_lane <= 16384 and n_lane % 256 == 0:
        return n_lane // 2                  # two balanced tiles (v7x: 2 TensorCores)
    return 4096                             # very large N: ~4096-wide tiles


def mlp_prod_decoder(x, w1, b1, w2, b2, *, block_n=None, apply_sigmoid=False,
                     out_dtype=jnp.float32, transposed_output=False,
                     min_pallas_batch=256, force_pallas=False):
    """Fused MLP decoder.

    x : (N, E) float32 (bf16 also accepted)
    w1: (H, E), b1: (H,)    -- PyTorch nn.Linear layout (out_features, in_features)
    w2: (C, H), b2: (C,)
    Returns (N, C) logits (or sigmoid(logits) if apply_sigmoid=True);
    (C, N) if transposed_output=True (skips the final XLA transpose pass).
    """
    n, e = x.shape
    h, e2 = w1.shape
    c, h2 = w2.shape
    assert e == e2 and h == h2 and b1.size == h and b2.size == c

    # Tiny batches: pallas_call fixed cost + 128-lane padding dwarf the real
    # work (the module's nominal batch is ~16); let XLA's fused dots handle it.
    if n < min_pallas_batch and not force_pallas:
        hid = jnp.maximum(x @ w1.T + b1, 0.0)
        out = hid @ w2.T + b2
        if apply_sigmoid:
            out = jax.nn.sigmoid(out)
        out = out.astype(out_dtype)
        return out.T if transposed_output else out

    if block_n is None:
        block_n = _choose_block_n(n)
    assert block_n % 128 == 0
    n_tiles = pl.cdiv(n, block_n)

    # Weights/biases: bf16 MXU inputs, f32 biases; all tiny and VMEM-resident.
    w1b = w1.astype(jnp.bfloat16)
    w2b = w2.astype(jnp.bfloat16)
    b1c = b1.reshape(h, 1).astype(jnp.float32)
    b2c = b2.reshape(c, 1).astype(jnp.float32)

    cost = pl.CostEstimate(
        flops=2 * n * (e * h + h * c),
        transcendentals=n * c if apply_sigmoid else 0,
        bytes_accessed=(n * e * x.dtype.itemsize
                        + n * c * jnp.dtype(out_dtype).itemsize
                        + (h * e + c * h) * 2 + (h + c) * 4),
    )

    out_t = pl.pallas_call(
        functools.partial(_mlp_prod_decoder_kernel, apply_sigmoid=apply_sigmoid),
        out_shape=jax.ShapeDtypeStruct((c, n), out_dtype),
        grid_spec=pl.GridSpec(
            grid=(n_tiles,),
            in_specs=[
                pl.BlockSpec((block_n, e), lambda i: (i, 0)),   # x tile (streams)
                pl.BlockSpec((h, e), lambda i: (0, 0)),         # W1 (VMEM-resident)
                pl.BlockSpec((h, 1), lambda i: (0, 0)),         # b1
                pl.BlockSpec((c, h), lambda i: (0, 0)),         # W2 (VMEM-resident)
                pl.BlockSpec((c, 1), lambda i: (0, 0)),         # b2
            ],
            out_specs=pl.BlockSpec((c, block_n), lambda i: (0, i)),
        ),
        compiler_params=pltpu.CompilerParams(
            dimension_semantics=("parallel",),                  # batch tiles independent
        ),
        cost_estimate=cost,
    )(x, w1b, b1c, w2b, b2c)

    return out_t if transposed_output else out_t.T             # (N, C) by default


def mlp_prod_decoder_predict(x, w1, b1, w2, b2, **kwargs):
    """torch.sigmoid(forward(x)) — sigmoid fused into the kernel epilogue."""
    return mlp_prod_decoder(x, w1, b1, w2, b2, apply_sigmoid=True, **kwargs)


# ---------------------------------------------------------------------------
# Self-test
# ---------------------------------------------------------------------------
if __name__ == "__main__":
    # Shapes consistent with the module: embedding_size=32, hidden=64, class_num=8.
    embedding_size, hidden_size, class_num = 32, 64, 8

    key = jax.random.PRNGKey(0)
    kx1, kx2, kw1, kb1, kw2, kb2 = jax.random.split(key, 6)

    w1 = jax.random.normal(kw1, (hidden_size, embedding_size), jnp.float32) * 0.1
    b1 = jax.random.normal(kb1, (hidden_size,), jnp.float32) * 0.1
    w2 = jax.random.normal(kw2, (class_num, hidden_size), jnp.float32) * 0.1
    b2 = jax.random.normal(kb2, (class_num,), jnp.float32) * 0.1

    def ref_f32(x, sig=False):
        out = jnp.maximum(x @ w1.T + b1, 0.0) @ w2.T + b2
        return jax.nn.sigmoid(out) if sig else out

    def ref_bf16(x, sig=False):
        xb = x.astype(jnp.bfloat16)
        hb = jnp.maximum(
            lax.dot_general(xb, w1.astype(jnp.bfloat16), (((1,), (1,)), ((), ())),
                            preferred_element_type=jnp.float32) + b1, 0.0)
        out = jnp.dot(hb.astype(jnp.bfloat16), w2.astype(jnp.bfloat16).T,
                      preferred_element_type=jnp.float32) + b2
        return jax.nn.sigmoid(out) if sig else out

    # 1) Nominal tiny batch (module's typical use): jnp fast path, exact f32.
    x_small = jax.random.normal(kx1, (16, embedding_size), jnp.float32)
    y_small = mlp_prod_decoder(x_small, w1, b1, w2, b2)
    jax.block_until_ready(y_small)
    assert y_small.shape == (16, class_num)
    assert jnp.allclose(y_small, ref_f32(x_small), atol=1e-5, rtol=1e-5)

    #    Force the Pallas kernel on the same tiny batch (exercises masked edge tile).
    y_small_k = mlp_prod_decoder(x_small, w1, b1, w2, b2, force_pallas=True)
    jax.block_until_ready(y_small_k)
    assert y_small_k.shape == (16, class_num)
    assert jnp.allclose(y_small_k, ref_bf16(x_small), atol=1e-2, rtol=1e-2)

    # 2) Kernel path on a ragged batch (330 -> one 384-wide tile, masked tail).
    x_big = jax.random.normal(kx2, (330, embedding_size), jnp.float32)
    y_big = mlp_prod_decoder(x_big, w1, b1, w2, b2)
    jax.block_until_ready(y_big)
    assert y_big.shape == (330, class_num)
    assert jnp.allclose(y_big, ref_bf16(x_big), atol=1e-2, rtol=1e-2)
    assert jnp.allclose(y_big, ref_f32(x_big), atol=5e-2, rtol=5e-2)

    #    Transposed (C, N) output path (skips the final XLA transpose pass).
    y_big_t = mlp_prod_decoder(x_big, w1, b1, w2, b2, transposed_output=True)
    jax.block_until_ready(y_big_t)
    assert y_big_t.shape == (class_num, 330)
    assert jnp.allclose(y_big_t.T, y_big, atol=1e-6, rtol=1e-6)

    #    predict(): sigmoid fused into the kernel epilogue.
    p_big = mlp_prod_decoder_predict(x_big, w1, b1, w2, b2)
    jax.block_until_ready(p_big)
    assert p_big.shape == (330, class_num)
    assert jnp.allclose(p_big, ref_bf16(x_big, sig=True), atol=1e-2, rtol=1e-2)
    assert bool(jnp.all((p_big >= 0.0) & (p_big <= 1.0)))

    print("KERNEL_OK")
</pallas_src>

<mosaic_0001>
module attributes {stable_mosaic.version = 11 : i64} {
  func.func @_mlp_prod_decoder_kernel(%arg0: i32, %arg1: memref<128x32xf32, #tpu.memory_space<vmem>>, %arg2: memref<64x32xbf16, #tpu.memory_space<vmem>>, %arg3: memref<64x1xf32, #tpu.memory_space<vmem>>, %arg4: memref<8x64xbf16, #tpu.memory_space<vmem>>, %arg5: memref<8x1xf32, #tpu.memory_space<vmem>>, %arg6: memref<8x128xf32, #tpu.memory_space<vmem>>) attributes {dimension_semantics = [#tpu.dimension_semantics<parallel>], iteration_bounds = array<i64: 1>, scalar_prefetch = 0 : i64, scratch_operands = 0 : i64, tpu.core_type = #tpu.core_type<tc>, window_params = [{transform_indices = @transform_0, window_bounds = array<i64: 128, 32>}, {pipeline_mode = #tpu.pipeline_mode<synchronous>, transform_indices = @transform_1, window_bounds = array<i64: 64, 32>}, {pipeline_mode = #tpu.pipeline_mode<synchronous>, transform_indices = @transform_2, window_bounds = array<i64: 64, 1>}, {pipeline_mode = #tpu.pipeline_mode<synchronous>, transform_indices = @transform_3, window_bounds = array<i64: 8, 64>}, {pipeline_mode = #tpu.pipeline_mode<synchronous>, transform_indices = @transform_4, window_bounds = array<i64: 8, 1>}, {transform_indices = @transform_5, window_bounds = array<i64: 8, 128>}]} {
    %c0 = arith.constant 0 : index
    %c0_0 = arith.constant 0 : index
    %0 = vector.load %arg1[%c0, %c0_0] : memref<128x32xf32, #tpu.memory_space<vmem>>, vector<128x32xf32>
    %1 = arith.truncf %0 : vector<128x32xf32> to vector<128x32xbf16>
    %c0_1 = arith.constant 0 : index
    %c0_2 = arith.constant 0 : index
    %2 = vector.load %arg2[%c0_1, %c0_2] : memref<64x32xbf16, #tpu.memory_space<vmem>>, vector<64x32xbf16>
    %cst = arith.constant dense<0.000000e+00> : vector<64x128xf32>
    %3 = tpu.matmul %2, %1, %cst {dimension_numbers = #tpu.dot_dimension_numbers<[1], [1], [0], [0], [0, 0, 1, 0], [], []>} : vector<64x32xbf16>, vector<128x32xbf16>, vector<64x128xf32> -> vector<64x128xf32>
    %c0_3 = arith.constant 0 : index
    %c0_4 = arith.constant 0 : index
    %4 = vector.load %arg3[%c0_3, %c0_4] : memref<64x1xf32, #tpu.memory_space<vmem>>, vector<64x1xf32>
    %5 = vector.broadcast %4 : vector<64x1xf32> to vector<64x128xf32>
    %6 = arith.addf %3, %5 : vector<64x128xf32>
    %cst_5 = arith.constant 0.000000e+00 : f32
    %7 = vector.broadcast %cst_5 : f32 to vector<64x128xf32>
    %8 = arith.maximumf %6, %7 : vector<64x128xf32>
    %c0_6 = arith.constant 0 : index
    %c0_7 = arith.constant 0 : index
    %9 = vector.load %arg4[%c0_6, %c0_7] : memref<8x64xbf16, #tpu.memory_space<vmem>>, vector<8x64xbf16>
    %10 = arith.truncf %8 : vector<64x128xf32> to vector<64x128xbf16>
    %cst_8 = arith.constant dense<0.000000e+00> : vector<8x128xf32>
    %11 = tpu.matmul %9, %10, %cst_8 {dimension_numbers = #tpu.dot_dimension_numbers<[1], [0], [0], [1], [0, 0, 1, 1], [], []>} : vector<8x64xbf16>, vector<64x128xbf16>, vector<8x128xf32> -> vector<8x128xf32>
    %c0_9 = arith.constant 0 : index
    %c0_10 = arith.constant 0 : index
    %12 = vector.load %arg5[%c0_9, %c0_10] : memref<8x1xf32, #tpu.memory_space<vmem>>, vector<8x1xf32>
    %13 = vector.broadcast %12 : vector<8x1xf32> to vector<8x128xf32>
    %14 = arith.addf %11, %13 : vector<8x128xf32>
    %c0_11 = arith.constant 0 : index
    %c0_12 = arith.constant 0 : index
    %15 = vector.load %arg6[%c0_11, %c0_12] : memref<8x128xf32, #tpu.memory_space<vmem>>, vector<8x128xf32>
    tpu.vector_store %arg6[%c0_11, %c0_12], %14 {strides = array<i32>} : memref<8x128xf32, #tpu.memory_space<vmem>>, vector<8x128xf32>,
    return
  }
  func.func @transform_0(%arg0: i32) -> (i32, i32) {
    %c0_i32 = arith.constant 0 : i32
    %c0_i32_0 = arith.constant 0 : i32
    return %arg0, %c0_i32 : i32, i32
  }
  func.func @transform_1(%arg0: i32) -> (i32, i32) {
    %c0_i32 = arith.constant 0 : i32
    %c0_i32_0 = arith.constant 0 : i32
    %c0_i32_1 = arith.constant 0 : i32
    return %c0_i32, %c0_i32_0 : i32, i32
  }
  func.func @transform_2(%arg0: i32) -> (i32, i32) {
    %c0_i32 = arith.constant 0 : i32
    %c0_i32_0 = arith.constant 0 : i32
    %c0_i32_1 = arith.constant 0 : i32
    return %c0_i32, %c0_i32_0 : i32, i32
  }
  func.func @transform_3(%arg0: i32) -> (i32, i32) {
    %c0_i32 = arith.constant 0 : i32
    %c0_i32_0 = arith.constant 0 : i32
    %c0_i32_1 = arith.constant 0 : i32
    return %c0_i32, %c0_i32_0 : i32, i32
  }
  func.func @transform_4(%arg0: i32) -> (i32, i32) {
    %c0_i32 = arith.constant 0 : i32
    %c0_i32_0 = arith.constant 0 : i32
    %c0_i32_1 = arith.constant 0 : i32
    return %c0_i32, %c0_i32_0 : i32, i32
  }
  func.func @transform_5(%arg0: i32) -> (i32, i32) {
    %c0_i32 = arith.constant 0 : i32
    %c0_i32_0 = arith.constant 0 : i32
    return %c0_i32, %arg0 : i32, i32
  }
}

</mosaic_0001>

<llo_original>
// kernel: tpu_custom_call.1
$region0: #{tpu_custom_call.1}
  #allocation0 [shape = 'u32[]', space=smem, size = 0x4, offset = 0x4, fixed_abs, tag = 'smem constant byte address 0x4 - core index']
  #allocation1 [shape = 'u32[144,128]{1,0:T(1,128)}', space=vmem, size = 0x12000, scoped, tag = 'internal scratch']
  %s0 = inlined_call_operand.vmem [shape: f32[16,32], index: 0, kind: input, shape index: {}]
  %s1 = inlined_call_operand.vmem [shape: bf16[64,32], index: 1, kind: input, shape index: {}]
  %s2 = inlined_call_operand.vmem [shape: f32[64,1], index: 2, kind: input, shape index: {}]
  %s3 = inlined_call_operand.vmem [shape: bf16[8,64], index: 3, kind: input, shape index: {}]
  %s4 = inlined_call_operand.vmem [shape: f32[8,1], index: 4, kind: input, shape index: {}]
  %s5 = inlined_call_operand.hbm [shape: f32[8,16], index: 5, kind: output, shape index: {}]
  %s6 = sld [smem:[#allocation0]]
  $region30: #{tpu_custom_call.1} parent=0
    _
  %s8 = ssub.s32 1, %s6
  %s9 = scalar_select 0, %s8, %s6
  $region1: #{tpu_custom_call.1} parent=0
    #allocation2 [shape = 'u8[4096]{0}', space=vmem, size = 0x1000, scoped, tag = 'output window, operand 0, single buffered']
    #allocation3 [shape = 's32[1]{0}', space=sflag, size = 0x4, scoped, tag = 'scoped memory for tpu_custom_call.1']
    %10 = vsyncpa [#allocation3], 0
    // Predicated region
    $region2: #{tpu_custom_call.1} parent=1 // pred_check
      _
    $region3: #{tpu_custom_call.1} parent=1 // pred_check_branch
      %12 = sbr.rel (0) target = $region5
    $region4: #{tpu_custom_call.1} parent=1 // pred_region
      _
    $region5: #{tpu_custom_call.1} parent=1 // pred_fallthru
      _
    // Predicated region
    $region6: #{tpu_custom_call.1} parent=1 // pred_check
      _
    $region7: #{tpu_custom_call.1} parent=1 // pred_check_branch
      %14 = sbr.rel (0) target = $region9
    $region8: #{tpu_custom_call.1} parent=1 // pred_region
      _
    $region9: #{tpu_custom_call.1} parent=1 // pred_fallthru
      _
    // Predicated region
    $region10: #{tpu_custom_call.1} parent=1 // pred_check
      _
    $region11: #{tpu_custom_call.1} parent=1 // pred_check_branch
      %16 = sbr.rel (0) target = $region13
    $region12: #{tpu_custom_call.1} parent=1 // pred_region
      _
    $region13: #{tpu_custom_call.1} parent=1 // pred_fallthru
      _
    // Predicated region
    $region14: #{tpu_custom_call.1} parent=1 // pred_check
      _
    $region15: #{tpu_custom_call.1} parent=1 // pred_check_branch
      %18 = sbr.rel (0) target = $region17
    $region16: #{tpu_custom_call.1} parent=1 // pred_region
      _
    $region17: #{tpu_custom_call.1} parent=1 // pred_fallthru
      _
    // Predicated region
    $region18: #{tpu_custom_call.1} parent=1 // pred_check
      _
    $region19: #{tpu_custom_call.1} parent=1 // pred_check_branch
      %20 = sbr.rel (0) target = $region21
    $region20: #{tpu_custom_call.1} parent=1 // pred_region
      _
    $region21: #{tpu_custom_call.1} parent=1 // pred_fallthru
      _
    %v22 = vld [vmem:[%s0] sm:$0xff]
    %v23 = vld [vmem:[%s0 + $0x8] sm:$0xff]
    %v24 = vld [vmem:[%s0 + $0x10] sm:$0xff]
    %v25 = vld [vmem:[%s0 + $0x18] sm:$0xff]
    %v26 = vld [vmem:[%s0 + $0x20] sm:$0xff]
    %v27 = vld [vmem:[%s0 + $0x28] sm:$0xff]
    %v28 = vld [vmem:[%s0 + $0x30] sm:$0xff]
    %v29 = vld [vmem:[%s0 + $0x38] sm:$0xff]
    %v30 = vld [vmem:[%s0 + $0x40] sm:$0xff]
    %v31 = vld [vmem:[%s0 + $0x48] sm:$0xff]
    %v32 = vld [vmem:[%s0 + $0x50] sm:$0xff]
    %v33 = vld [vmem:[%s0 + $0x58] sm:$0xff]
    %v34 = vld [vmem:[%s0 + $0x60] sm:$0xff]
    %v35 = vld [vmem:[%s0 + $0x68] sm:$0xff]
    %v36 = vld [vmem:[%s0 + $0x70] sm:$0xff]
    %v37 = vld [vmem:[%s0 + $0x78] sm:$0xff]
    %v38 = vpack.c.bf16 %v23, %v22
    %v39 = vpack.c.bf16 %v25, %v24
    %v40 = vpack.c.bf16 %v27, %v26
    %v41 = vpack.c.bf16 %v29, %v28
    %v42 = vpack.c.bf16 %v31, %v30
    %v43 = vpack.c.bf16 %v33, %v32
    %v44 = vpack.c.bf16 %v35, %v34
    %v45 = vpack.c.bf16 %v37, %v36
    %v46 = vld [vmem:[%s1] sm:$0xf]
    %v47 = vld [vmem:[%s1 + $0x4] sm:$0xf]
    %v48 = vld [vmem:[%s1 + $0x8] sm:$0xf]
    %v49 = vld [vmem:[%s1 + $0xc] sm:$0xf]
    %v50 = vld [vmem:[%s1 + $0x10] sm:$0xf]
    %v51 = vld [vmem:[%s1 + $0x14] sm:$0xf]
    %v52 = vld [vmem:[%s1 + $0x18] sm:$0xf]
    %v53 = vld [vmem:[%s1 + $0x1c] sm:$0xf]
    %v54 = vld [vmem:[%s2] sm:$0xff]
    %v55 = vld [vmem:[%s2 + $0x8] sm:$0xff]
    %v56 = vld [vmem:[%s2 + $0x10] sm:$0xff]
    %v57 = vld [vmem:[%s2 + $0x18] sm:$0xff]
    %v58 = vld [vmem:[%s2 + $0x20] sm:$0xff]
    %v59 = vld [vmem:[%s2 + $0x28] sm:$0xff]
    %v60 = vld [vmem:[%s2 + $0x30] sm:$0xff]
    %v61 = vld [vmem:[%s2 + $0x38] sm:$0xff]
    %63 = vset.pattern.permute.xlu0 0
    %64 = vperm.xlu0 %63, %v54
    %v65 = vpop.permute.xlu0 %64
    %68 = vset.pattern.permute.xlu0 0
    %69 = vperm.xlu0 %68, %v55
    %v70 = vpop.permute.xlu0 %69
    %73 = vset.pattern.permute.xlu0 0
    %74 = vperm.xlu0 %73, %v56
    %v75 = vpop.permute.xlu0 %74
    %78 = vset.pattern.permute.xlu0 0
    %79 = vperm.xlu0 %78, %v57
    %v80 = vpop.permute.xlu0 %79
    %83 = vset.pattern.permute.xlu0 0
    %84 = vperm.xlu0 %83, %v58
    %v85 = vpop.permute.xlu0 %84
    %88 = vset.pattern.permute.xlu0 0
    %89 = vperm.xlu0 %88, %v59
    %v90 = vpop.permute.xlu0 %89
    %93 = vset.pattern.permute.xlu0 0
    %94 = vperm.xlu0 %93, %v60
    %v95 = vpop.permute.xlu0 %94
    %98 = vset.pattern.permute.xlu0 0
    %99 = vperm.xlu0 %98, %v61
    %v100 = vpop.permute.xlu0 %99
    %v110 = vunpack.c.l.b16 %v46
    %v111 = vunpack.c.l.b16 %v47
    %v112 = vunpack.c.l.b16 %v48
    %v113 = vunpack.c.l.b16 %v49
    %v114 = vunpack.c.l.b16 %v50
    %v115 = vunpack.c.l.b16 %v51
    %v116 = vunpack.c.l.b16 %v52
    %v117 = vunpack.c.l.b16 %v53
    %v118 = vpack.c.b16 %v111, %v110
    %v119 = vpack.c.b16 %v113, %v112
    %v120 = vpack.c.b16 %v115, %v114
    %v121 = vpack.c.b16 %v117, %v116
    %vm122 = vcmask 261120
    %v124 = vsel %vm122, %v118, 0
    %v127 = vsel %vm122, %v119, 0
    %v130 = vsel %vm122, %v120, 0
    %v133 = vsel %vm122, %v121, 0
    %v136 = vsel %vm122, %v38, 0
    %v139 = vsel %vm122, %v39, 0
    %v142 = vsel %vm122, %v40, 0
    %v145 = vsel %vm122, %v41, 0
    %v148 = vsel %vm122, %v42, 0
    %v151 = vsel %vm122, %v43, 0
    %v154 = vsel %vm122, %v44, 0
    %v157 = vsel %vm122, %v45, 0
    %159 = vmatprep.subr.bf16.mxu0 0
    %160 = vmatpush1.bf16.xpose.msra.mxu0 %v136
    %161 = vmatprep.subr.bf16.mxu0 0
    %162 = vmatpush1.bf16.xpose.msra.mxu0 %v139
    %163 = vmatprep.subr.bf16.mxu0 0
    %164 = vmatpush1.bf16.xpose.msra.mxu0 %v142
    %165 = vmatprep.subr.bf16.mxu0 0
    %166 = vmatpush1.bf16.xpose.msra.mxu0 %v145
    %167 = vmatprep.subr.bf16.mxu0 0
    %168 = vmatpush1.bf16.xpose.msra.mxu0 %v148
    %169 = vmatprep.subr.bf16.mxu0 0
    %170 = vmatpush1.bf16.xpose.msra.mxu0 %v151
    %171 = vmatprep.subr.bf16.mxu0 0
    %172 = vmatpush1.bf16.xpose.msra.mxu0 %v154
    %173 = vmatprep.subr.bf16.mxu0 0
    %174 = vmatpush1.bf16.xpose.msra.mxu0 %v157
    %175 = vmatprep.subr.bf16.mxu0 0
    %176 = vmatpush1.bf16.xpose.msra.mxu0 0
    %177 = vmatprep.subr.bf16.mxu0 0
    %178 = vmatpush1.bf16.xpose.msra.mxu0 0
    %179 = vmatprep.subr.bf16.mxu0 0
    %180 = vmatpush1.bf16.xpose.msra.mxu0 0
    %181 = vmatprep.subr.bf16.mxu0 0
    %182 = vmatpush1.bf16.xpose.msra.mxu0 0
    %183 = vmatprep.subr.bf16.mxu0 0
    %184 = vmatpush1.bf16.xpose.msra.mxu0 0
    %185 = vmatprep.subr.bf16.mxu0 0
    %186 = vmatpush1.bf16.xpose.msra.mxu0 0
    %187 = vmatprep.subr.bf16.mxu0 0
    %188 = vmatpush1.bf16.xpose.msra.mxu0 0
    %189 = vmatprep.subr.bf16.mxu0 0
    %190 = vmatpush1.bf16.xpose.msra.mxu0 0
    %191 = vmatprep.mubr.bf16.mxu0 0
    %192 = vmatmul.mubr.bf16.gmra.mrb[0].mxu0 %v124
    %v193 = vpop.f32.mrb[0].mxu0
    %v194 = vadd.f32 %v65, %v193
    %v195 = vpop.f32.mrb[0].mxu0
    %v196 = vpop.f32.mrb[0].mxu0
    %v197 = vadd.f32 %v70, %v196
    %v198 = vpop.f32.mrb[0].mxu0
    %199 = vmatprep.mubr.bf16.mxu0 0
    %200 = vmatmul.mubr.bf16.gmra.mrb[0].mxu0 %v127
    %v201 = vpop.f32.mrb[0].mxu0
    %v202 = vadd.f32 %v75, %v201
    %v203 = vpop.f32.mrb[0].mxu0
    %v204 = vpop.f32.mrb[0].mxu0
    %v205 = vadd.f32 %v80, %v204
    %v206 = vpop.f32.mrb[0].mxu0
    %207 = vmatprep.mubr.bf16.mxu0 0
    %208 = vmatmul.mubr.bf16.gmra.mrb[0].mxu0 %v130
    %v209 = vpop.f32.mrb[0].mxu0
    %v210 = vadd.f32 %v85, %v209
    %v211 = vpop.f32.mrb[0].mxu0
    %v212 = vpop.f32.mrb[0].mxu0
    %v213 = vadd.f32 %v90, %v212
    %v214 = vpop.f32.mrb[0].mxu0
    %215 = vmatprep.mubr.bf16.mxu0 0
    %216 = vmatmul.mubr.bf16.gmra.mrb[0].mxu0 %v133
    %v217 = vpop.f32.mrb[0].mxu0
    %v218 = vadd.f32 %v95, %v217
    %v219 = vpop.f32.mrb[0].mxu0
    %v220 = vpop.f32.mrb[0].mxu0
    %v221 = vadd.f32 %v100, %v220
    %v222 = vpop.f32.mrb[0].mxu0
    %223 = vdwg.mxu0
    %v224 = vmax.f32 %v194, 0.0
    %v225 = vmax.f32 %v197, 0.0
    %v226 = vmax.f32 %v202, 0.0
    %v227 = vmax.f32 %v205, 0.0
    %v228 = vmax.f32 %v210, 0.0
    %v229 = vmax.f32 %v213, 0.0
    %v230 = vmax.f32 %v218, 0.0
    %v231 = vmax.f32 %v221, 0.0
    %v232 = vld [vmem:[%s3] sm:$0xf]
    %v233 = vpack.c.bf16 %v225, %v224
    %v234 = vpack.c.bf16 %v227, %v226
    %v235 = vpack.c.bf16 %v229, %v228
    %v236 = vpack.c.bf16 %v231, %v230
    %v237 = vld [vmem:[%s4] sm:$0xff]
    %239 = vset.pattern.permute.xlu0 0
    %240 = vperm.xlu0 %239, %v237
    %v241 = vpop.permute.xlu0 %240
    %vm243 = vcmask 523264
    %v245 = vsel %vm243, %v232, 0
    %247 = vmatprep.subr.bf16.mxu0 0
    %248 = vmatpush1.bf16.msra.mxu0 %v233
    %249 = vmatprep.subr.bf16.mxu0 0
    %250 = vmatpush1.bf16.msra.mxu0 %v234
    %251 = vmatprep.subr.bf16.mxu0 0
    %252 = vmatpush1.bf16.msra.mxu0 %v235
    %253 = vmatprep.subr.bf16.mxu0 0
    %254 = vmatpush1.bf16.msra.mxu0 %v236
    %255 = vmatprep.subr.bf16.mxu0 0
    %256 = vmatpush1.bf16.msra.mxu0 0
    %257 = vmatprep.subr.bf16.mxu0 0
    %258 = vmatpush1.bf16.msra.mxu0 0
    %259 = vmatprep.subr.bf16.mxu0 0
    %260 = vmatpush1.bf16.msra.mxu0 0
    %261 = vmatprep.subr.bf16.mxu0 0
    %262 = vmatpush1.bf16.msra.mxu0 0
    %263 = vmatprep.subr.bf16.mxu0 0
    %264 = vmatpush1.bf16.msra.mxu0 0
    %265 = vmatprep.subr.bf16.mxu0 0
    %266 = vmatpush1.bf16.msra.mxu0 0
    %267 = vmatprep.subr.bf16.mxu0 0
    %268 = vmatpush1.bf16.msra.mxu0 0
    %269 = vmatprep.subr.bf16.mxu0 0
    %270 = vmatpush1.bf16.msra.mxu0 0
    %271 = vmatprep.subr.bf16.mxu0 0
    %272 = vmatpush1.bf16.msra.mxu0 0
    %273 = vmatprep.subr.bf16.mxu0 0
    %274 = vmatpush1.bf16.msra.mxu0 0
    %275 = vmatprep.subr.bf16.mxu0 0
    %276 = vmatpush1.bf16.msra.mxu0 0
    %277 = vmatprep.subr.bf16.mxu0 0
    %278 = vmatpush1.bf16.msra.mxu0 0
    %279 = vmatprep.mubr.bf16.mxu0 0
    %280 = vmatmul.mubr.bf16.gmra.mrb[0].mxu0 %v245
    %v281 = vpop.f32.mrb[0].mxu0
    %v282 = vadd.f32 %v241, %v281
    %v283 = vpop.f32.mrb[0].mxu0
    %v284 = vpop.f32.mrb[0].mxu0
    %v285 = vpop.f32.mrb[0].mxu0
    %286 = vdwg.mxu0
    %287 = vst [vmem:[#allocation2] sm:$0xff] %v282
    // Predicated region
    $region22: #{tpu_custom_call.1} parent=1 // pred_check
      _
    $region23: #{tpu_custom_call.1} parent=1 // pred_check_branch
      %289 = sbr.rel (0) target = $region25
    $region24: #{tpu_custom_call.1} parent=1 // pred_region
      %s291 = ssub.s32 128, 128
      %292 = vsyncadd [#allocation3], %s291
      %s294 = sshll.u32 [#allocation2], 4
      %s295 = int_to_ptr.vmem [resolvable:$true] %s294
      %297 = dma.vmem_to_hbm [thread:$0]  %s295, 128, %s5, [#allocation3]
    $region25: #{tpu_custom_call.1} parent=1 // pred_fallthru
      _
    // Predicated region
    $region26: #{tpu_custom_call.1} parent=1 // pred_check
      _
    $region27: #{tpu_custom_call.1} parent=1 // pred_check_branch
      %299 = sbr.rel (0) target = $region29
    $region28: #{tpu_custom_call.1} parent=1 // pred_region
      %300 = dma.done [#allocation3], 128
    $region29: #{tpu_custom_call.1} parent=1 // pred_fallthru
      _
    %301 = vsyncpa [#allocation3], 1

</llo_original>
